<compile_context>
chip_gen: v6e
topology: v6e:2x2x1
jax: 0.10.0
libtpu: 0.0.40
codegen_flags: <defaults>
</compile_context>

<pallas_src>
import jax
import jax.numpy as jnp
from jax.experimental import pallas as pl
from jax.experimental.pallas import tpu as pltpu

# Small, shape-consistent config
B = 2        # cfg.batch_size
S = 16       # sequence length
H = 128      # hidden size (lane-dense stand-in; real DeBERTa-large = 1024)
P = 3        # number of (src, end) span pairs per notebook_id
VOCAB = 64

TS = 8               # sequence-tile rows per grid step (use ~512 at real shapes)
OUT_R, OUT_C = 8, 128  # lane-dense output tile per batch row


def span_pool_fc_kernel(bounds_ref,            # (B, 2) int32, SMEM (scalar prefetch): [min src, max end] per b
                        src_ref, end_ref,       # (1, 1, 128) int32, VMEM: per-span src / clamped end, one lane per span
                        invc_ref,               # (1, 1, 128) f32,  VMEM: 1/count per span (0 for pad lanes, NaN for empty spans)
                        feat_ref,               # (1, TS, H) feature tile, VMEM
                        w_ref,                  # (1, H) f32 fc weight, VMEM
                        b_ref,                  # (1,)  f32 fc bias, SMEM
                        out_ref):               # (1, 8, 128) f32 output tile == accumulator
    bi = pl.program_id(0)
    si = pl.program_id(1)
    ns = pl.num_programs(1)
    ts = feat_ref.shape[1]

    # ---- init accumulator on first sequence tile of this batch row ----
    @pl.when(si == 0)
    def _():
        out_ref[...] = jnp.zeros_like(out_ref)

    tile_start = si * ts
    lo = bounds_ref[bi, 0]
    hi = bounds_ref[bi, 1]
    # skip compute on tiles that intersect no span (DMA of the tile still streams)
    active = jnp.logical_and(tile_start <= hi, tile_start + (ts - 1) >= lo)

    @pl.when(active)
    def _():
        feat = feat_ref[0]                                               # (TS, H)
        feat = jnp.where(jnp.isnan(feat), jnp.zeros_like(feat), feat)
        feat = feat.astype(jnp.float32)

        # fc commuted before the pooling: per-token score = <feat[t,:], w>  (exact f32)
        w = w_ref[...].astype(jnp.float32)                               # (1, H)
        scores = jnp.sum(feat * w, axis=-1, keepdims=True)               # (TS, 1) f32

        # 0/1 span mask over this tile: mask[t, p] = (pos in [src_p, end_p])
        pos = tile_start + jax.lax.broadcasted_iota(jnp.int32, (ts, OUT_C), 0)   # (TS, 128)
        mask = jnp.logical_and(pos >= src_ref[0], pos <= end_ref[0])     # (TS, 128)
        partial = jnp.sum(mask.astype(jnp.float32) * scores,
                          axis=0, keepdims=True)                         # (1, 128) span partial sums

        # accumulate (row-replicated so every VMEM store stays a full dense tile)
        out_ref[...] += jnp.broadcast_to(partial, out_ref.shape)

    # ---- finalize on last sequence tile: mean scale (f32) + bias ----
    @pl.when(si == ns - 1)
    def _():
        out_ref[...] = out_ref[...] * invc_ref[0] + b_ref[0]


def pairwise_forward(feature, position_list, fc_w, fc_b, *, ts=TS):
    """feature: (B, S, H); position_list: (B, P, 2) int32 (src, end) inclusive spans.
    Returns (B, P) logits; flattened row-major it matches the PyTorch `pred` list
    order [batch0 span0, batch0 span1, ..., batch1 span0, ...]."""
    b_, s_, h_ = feature.shape
    _, p_, _ = position_list.shape
    assert p_ <= OUT_C, "span axis must fit one 128-lane row"
    assert s_ % ts == 0 and ts % 8 == 0 and h_ % 128 == 0

    src = position_list[..., 0].astype(jnp.int32)                        # (B, P)
    end = position_list[..., 1].astype(jnp.int32)                        # (B, P)
    end_c = jnp.minimum(end, s_ - 1)                                     # PyTorch slice truncation at S
    count = end_c - src + 1                                              # actual pooled rows
    inv_count = jnp.where(count > 0,
                          1.0 / jnp.maximum(count, 1).astype(jnp.float32),
                          jnp.float32(jnp.nan))                          # empty span -> NaN (torch.mean of empty)

    # pad the span axis to a full 128-lane vector; padded lanes get an empty span + zero scale
    pad = OUT_C - p_
    src_lanes = jnp.pad(src, ((0, 0), (0, pad)), constant_values=1)[:, None, :]       # (B, 1, 128)
    end_lanes = jnp.pad(end_c, ((0, 0), (0, pad)), constant_values=0)[:, None, :]     # (B, 1, 128)
    invc_lanes = jnp.pad(inv_count, ((0, 0), (0, pad)), constant_values=0.0)[:, None, :]

    # per-batch [min src, max end] span bounds for the pl.when tile skip (scalar prefetch -> SMEM)
    bounds = jnp.stack([src.min(axis=1), end_c.max(axis=1)], axis=1).astype(jnp.int32)  # (B, 2)

    bias = fc_b.reshape(1).astype(jnp.float32)
    num_s = s_ // ts

    out = pl.pallas_call(
        span_pool_fc_kernel,
        out_shape=jax.ShapeDtypeStruct((b_, OUT_R, OUT_C), jnp.float32),
        grid_spec=pltpu.PrefetchScalarGridSpec(
            num_scalar_prefetch=1,
            grid=(b_, num_s),
            in_specs=[
                pl.BlockSpec((1, 1, OUT_C), lambda b, s, bounds: (b, 0, 0)),   # src lanes
                pl.BlockSpec((1, 1, OUT_C), lambda b, s, bounds: (b, 0, 0)),   # end lanes
                pl.BlockSpec((1, 1, OUT_C), lambda b, s, bounds: (b, 0, 0)),   # 1/count lanes (f32)
                pl.BlockSpec((1, ts, h_),   lambda b, s, bounds: (b, s, 0)),   # streamed feature tile
                pl.BlockSpec((1, h_),       lambda b, s, bounds: (0, 0)),      # fc weight (lane-resident)
                pl.BlockSpec(memory_space=pltpu.MemorySpace.SMEM),             # fc bias scalar
            ],
            out_specs=pl.BlockSpec((1, OUT_R, OUT_C), lambda b, s, bounds: (b, 0, 0)),
        ),
        compiler_params=pltpu.CompilerParams(
            dimension_semantics=("parallel", "arbitrary"),   # b shards across v7x's 2 TCs; s is the carried reduction
            vmem_limit_bytes=32 * 1024 * 1024,
        ),
    )(bounds, src_lanes, end_lanes, invc_lanes, feature, fc_w.astype(jnp.float32), bias)

    return out[:, 0, :p_]                                    # (B, P) logits, one slice


def reference_forward(feature, position_list, fc_w, fc_b):
    """Pure-JAX mirror of the PyTorch loop (span mean pooling + fc)."""
    pred = []
    b_, p_, _ = position_list.shape
    for i in range(b_):
        for idx in range(p_):
            s0, e0 = int(position_list[i, idx, 0]), int(position_list[i, idx, 1])
            subsequent = feature[i, s0:e0 + 1, :][None]        # (1, span, H)
            embedding = jnp.mean(subsequent, axis=1)           # (1, H)
            pred.append(jnp.sum(embedding * fc_w, axis=-1, keepdims=True) + fc_b)  # (1, 1)
    return pred


if __name__ == "__main__":
    key = jax.random.PRNGKey(0)
    k_emb, k_ids, k_w, k_b = jax.random.split(key, 4)

    # --- synthetic backbone: deterministic embedding lookup as last_hidden_state ---
    inputs = {"input_ids": jax.random.randint(k_ids, (B, S), 0, VOCAB, dtype=jnp.int32)}
    emb_table = jax.random.normal(k_emb, (VOCAB, H), dtype=jnp.float32) * 0.02
    feature = emb_table[inputs["input_ids"]]                  # (B, S, H)

    # fc = nn.Linear(hidden_size, 1): weight (1, H), bias (1,)
    fc_w = jax.random.normal(k_w, (1, H), dtype=jnp.float32) * 0.02
    fc_b = jax.random.normal(k_b, (1,), dtype=jnp.float32) * 0.02

    # (src, end) inclusive span pairs per batch element
    position_list = jnp.array(
        [[[0, 3], [4, 9], [10, 15]],
         [[1, 5], [6, 6], [7, 14]]], dtype=jnp.int32)         # (B, P, 2)

    logits = pairwise_forward(feature, position_list, fc_w, fc_b)
    logits = jax.block_until_ready(logits)                    # (B, P)

    ref = reference_forward(feature, position_list, fc_w, fc_b)
    # test-only glue: flatten row-major to the PyTorch pred-list order for comparison
    pred = [logits[i, p].reshape(1, 1) for i in range(B) for p in range(P)]
    for got, want in zip(pred, ref):
        assert got.shape == (1, 1)
        assert jnp.allclose(got, want, atol=1e-4, rtol=1e-4), (got, want)

    print("KERNEL_OK")
</pallas_src>

<mosaic_0001>
module attributes {stable_mosaic.version = 11 : i64} {
  func.func @span_pool_fc_kernel(%arg0: i32, %arg1: i32, %arg2: memref<2x2xi32, #tpu.memory_space<smem>>, %arg3: memref<1x1x128xi32, #tpu.memory_space<vmem>>, %arg4: memref<1x1x128xi32, #tpu.memory_space<vmem>>, %arg5: memref<1x1x128xf32, #tpu.memory_space<vmem>>, %arg6: memref<1x8x128xf32, #tpu.memory_space<vmem>>, %arg7: memref<1x128xf32, #tpu.memory_space<vmem>>, %arg8: memref<1xf32, #tpu.memory_space<smem>>, %arg9: memref<1x8x128xf32, #tpu.memory_space<vmem>>) attributes {dimension_semantics = [#tpu.dimension_semantics<parallel>, #tpu.dimension_semantics<arbitrary>], iteration_bounds = array<i64: 2, 2>, scalar_prefetch = 1 : i64, scratch_operands = 0 : i64, tpu.core_type = #tpu.core_type<tc>, window_params = [{transform_indices = @transform_0, window_bounds = array<i64: 1, 1, 128>}, {transform_indices = @transform_1, window_bounds = array<i64: 1, 1, 128>}, {transform_indices = @transform_2, window_bounds = array<i64: 1, 1, 128>}, {transform_indices = @transform_3, window_bounds = array<i64: 1, 8, 128>}, {pipeline_mode = #tpu.pipeline_mode<synchronous>, transform_indices = @transform_4, window_bounds = array<i64: 1, 128>}, {transform_indices = @transform_5, window_bounds = array<i64: 1>}, {transform_indices = @transform_6, window_bounds = array<i64: 1, 8, 128>}]} {
    %c0_i32 = arith.constant 0 : i32
    %0 = arith.cmpi eq, %arg1, %c0_i32 : i32
    %1 = arith.extui %0 : i1 to i32
    %c0_i32_0 = arith.constant 0 : i32
    %2 = arith.cmpi ne, %1, %c0_i32_0 : i32
    scf.if %2 {
      %cst = arith.constant 0.000000e+00 : f32
      %17 = vector.broadcast %cst : f32 to vector<1x8x128xf32>
      %c0_3 = arith.constant 0 : index
      %c0_4 = arith.constant 0 : index
      %c0_5 = arith.constant 0 : index
      %18 = vector.load %arg9[%c0_3, %c0_4, %c0_5] : memref<1x8x128xf32, #tpu.memory_space<vmem>>, vector<1x8x128xf32>
      tpu.vector_store %arg9[%c0_3, %c0_4, %c0_5], %17 {strides = array<i32>} : memref<1x8x128xf32, #tpu.memory_space<vmem>>, vector<1x8x128xf32>,
    } else {
    }
    %c8_i32 = arith.constant 8 : i32
    %3 = arith.muli %arg1, %c8_i32 : i32
    %4 = arith.index_cast %arg0 : i32 to index
    %c0 = arith.constant 0 : index
    %5 = memref.load %arg2[%4, %c0] : memref<2x2xi32, #tpu.memory_space<smem>>
    %6 = arith.index_cast %arg0 : i32 to index
    %c1 = arith.constant 1 : index
    %7 = memref.load %arg2[%6, %c1] : memref<2x2xi32, #tpu.memory_space<smem>>
    %8 = arith.cmpi sle, %3, %7 : i32
    %c7_i32 = arith.constant 7 : i32
    %9 = arith.addi %3, %c7_i32 : i32
    %10 = arith.cmpi sge, %9, %5 : i32
    %11 = arith.andi %8, %10 : i1
    %12 = arith.extui %11 : i1 to i32
    %c0_i32_1 = arith.constant 0 : i32
    %13 = arith.cmpi ne, %12, %c0_i32_1 : i32
    scf.if %13 {
      %c0_3 = arith.constant 0 : index
      %c0_4 = arith.constant 0 : index
      %c0_5 = arith.constant 0 : index
      %17 = vector.load %arg6[%c0_3, %c0_4, %c0_5] : memref<1x8x128xf32, #tpu.memory_space<vmem>>, vector<1x8x128xf32>
      %18 = vector.shape_cast %17 : vector<1x8x128xf32> to vector<8x128xf32>
      %19 = arith.cmpf one, %18, %18 : vector<8x128xf32>
      %cst = arith.constant 0.000000e+00 : f32
      %20 = vector.broadcast %cst : f32 to vector<8x128xf32>
      %21 = arith.select %19, %20, %18 : vector<8x128xi1>, vector<8x128xf32>
      %c0_6 = arith.constant 0 : index
      %c0_7 = arith.constant 0 : index
      %22 = vector.load %arg7[%c0_6, %c0_7] : memref<1x128xf32, #tpu.memory_space<vmem>>, vector<1x128xf32>
      %23 = vector.broadcast %22 : vector<1x128xf32> to vector<8x128xf32>
      %24 = arith.mulf %21, %23 : vector<8x128xf32>
      %cst_8 = arith.constant dense<0.000000e+00> : vector<8xf32>
      %25 = vector.multi_reduction <add>, %24, %cst_8 [1] : vector<8x128xf32> to vector<8xf32>
      %26 = vector.shape_cast %25 : vector<8xf32> to vector<8x1xf32>
      %27 = tpu.iota {dimensions = array<i32: 0>} : vector<8x128xi32>
      %28 = vector.broadcast %3 : i32 to vector<8x128xi32>
      %29 = arith.addi %28, %27 : vector<8x128xi32>
      %c0_9 = arith.constant 0 : index
      %c0_10 = arith.constant 0 : index
      %c0_11 = arith.constant 0 : index
      %30 = vector.load %arg3[%c0_9, %c0_10, %c0_11] : memref<1x1x128xi32, #tpu.memory_space<vmem>>, vector<1x1x128xi32>
      %31 = vector.shape_cast %30 : vector<1x1x128xi32> to vector<1x128xi32>
      %32 = vector.broadcast %31 : vector<1x128xi32> to vector<8x128xi32>
      %33 = arith.cmpi sge, %29, %32 : vector<8x128xi32>
      %c0_12 = arith.constant 0 : index
      %c0_13 = arith.constant 0 : index
      %c0_14 = arith.constant 0 : index
      %34 = vector.load %arg4[%c0_12, %c0_13, %c0_14] : memref<1x1x128xi32, #tpu.memory_space<vmem>>, vector<1x1x128xi32>
      %35 = vector.shape_cast %34 : vector<1x1x128xi32> to vector<1x128xi32>
      %36 = vector.broadcast %35 : vector<1x128xi32> to vector<8x128xi32>
      %37 = arith.cmpi sle, %29, %36 : vector<8x128xi32>
      %38 = arith.andi %33, %37 : vector<8x128xi1>
      %39 = arith.extui %38 : vector<8x128xi1> to vector<8x128xi32>
      %40 = arith.sitofp %39 : vector<8x128xi32> to vector<8x128xf32>
      %41 = vector.broadcast %26 : vector<8x1xf32> to vector<8x128xf32>
      %42 = arith.mulf %40, %41 : vector<8x128xf32>
      %cst_15 = arith.constant dense<0.000000e+00> : vector<128xf32>
      %43 = vector.multi_reduction <add>, %42, %cst_15 [0] : vector<8x128xf32> to vector<128xf32>
      %44 = vector.shape_cast %43 : vector<128xf32> to vector<1x128xf32>
      %c0_16 = arith.constant 0 : index
      %c0_17 = arith.constant 0 : index
      %c0_18 = arith.constant 0 : index
      %45 = vector.load %arg9[%c0_16, %c0_17, %c0_18] : memref<1x8x128xf32, #tpu.memory_space<vmem>>, vector<1x8x128xf32>
      %46 = vector.shape_cast %44 : vector<1x128xf32> to vector<1x1x128xf32>
      %47 = vector.broadcast %46 : vector<1x1x128xf32> to vector<1x8x128xf32>
      %48 = arith.addf %45, %47 : vector<1x8x128xf32>
      %c0_19 = arith.constant 0 : index
      %c0_20 = arith.constant 0 : index
      %c0_21 = arith.constant 0 : index
      %49 = vector.load %arg9[%c0_19, %c0_20, %c0_21] : memref<1x8x128xf32, #tpu.memory_space<vmem>>, vector<1x8x128xf32>
      tpu.vector_store %arg9[%c0_19, %c0_20, %c0_21], %48 {strides = array<i32>} : memref<1x8x128xf32, #tpu.memory_space<vmem>>, vector<1x8x128xf32>,
    } else {
    }
    %c1_i32 = arith.constant 1 : i32
    %14 = arith.cmpi eq, %arg1, %c1_i32 : i32
    %15 = arith.extui %14 : i1 to i32
    %c0_i32_2 = arith.constant 0 : i32
    %16 = arith.cmpi ne, %15, %c0_i32_2 : i32
    scf.if %16 {
      %c0_3 = arith.constant 0 : index
      %c0_4 = arith.constant 0 : index
      %c0_5 = arith.constant 0 : index
      %17 = vector.load %arg9[%c0_3, %c0_4, %c0_5] : memref<1x8x128xf32, #tpu.memory_space<vmem>>, vector<1x8x128xf32>
      %c0_6 = arith.constant 0 : index
      %c0_7 = arith.constant 0 : index
      %c0_8 = arith.constant 0 : index
      %18 = vector.load %arg5[%c0_6, %c0_7, %c0_8] : memref<1x1x128xf32, #tpu.memory_space<vmem>>, vector<1x1x128xf32>
      %19 = vector.shape_cast %18 : vector<1x1x128xf32> to vector<1x128xf32>
      %20 = vector.shape_cast %19 : vector<1x128xf32> to vector<1x1x128xf32>
      %21 = vector.broadcast %20 : vector<1x1x128xf32> to vector<1x8x128xf32>
      %22 = arith.mulf %17, %21 : vector<1x8x128xf32>
      %c0_9 = arith.constant 0 : index
      %23 = memref.load %arg8[%c0_9] : memref<1xf32, #tpu.memory_space<smem>>
      %24 = vector.broadcast %23 : f32 to vector<1x8x128xf32>
      %25 = arith.addf %22, %24 : vector<1x8x128xf32>
      %c0_10 = arith.constant 0 : index
      %c0_11 = arith.constant 0 : index
      %c0_12 = arith.constant 0 : index
      %26 = vector.load %arg9[%c0_10, %c0_11, %c0_12] : memref<1x8x128xf32, #tpu.memory_space<vmem>>, vector<1x8x128xf32>
      tpu.vector_store %arg9[%c0_10, %c0_11, %c0_12], %25 {strides = array<i32>} : memref<1x8x128xf32, #tpu.memory_space<vmem>>, vector<1x8x128xf32>,
    } else {
    }
    return
  }
  func.func @transform_0(%arg0: i32, %arg1: i32, %arg2: memref<2x2xi32, #tpu.memory_space<smem>>) -> (i32, i32, i32) {
    %c0_i32 = arith.constant 0 : i32
    %c0_i32_0 = arith.constant 0 : i32
    %c0_i32_1 = arith.constant 0 : i32
    return %arg0, %c0_i32, %c0_i32_0 : i32, i32, i32
  }
  func.func @transform_1(%arg0: i32, %arg1: i32, %arg2: memref<2x2xi32, #tpu.memory_space<smem>>) -> (i32, i32, i32) {
    %c0_i32 = arith.constant 0 : i32
    %c0_i32_0 = arith.constant 0 : i32
    %c0_i32_1 = arith.constant 0 : i32
    return %arg0, %c0_i32, %c0_i32_0 : i32, i32, i32
  }
  func.func @transform_2(%arg0: i32, %arg1: i32, %arg2: memref<2x2xi32, #tpu.memory_space<smem>>) -> (i32, i32, i32) {
    %c0_i32 = arith.constant 0 : i32
    %c0_i32_0 = arith.constant 0 : i32
    %c0_i32_1 = arith.constant 0 : i32
    return %arg0, %c0_i32, %c0_i32_0 : i32, i32, i32
  }
  func.func @transform_3(%arg0: i32, %arg1: i32, %arg2: memref<2x2xi32, #tpu.memory_space<smem>>) -> (i32, i32, i32) {
    %c0_i32 = arith.constant 0 : i32
    %c0_i32_0 = arith.constant 0 : i32
    return %arg0, %arg1, %c0_i32 : i32, i32, i32
  }
  func.func @transform_4(%arg0: i32, %arg1: i32, %arg2: memref<2x2xi32, #tpu.memory_space<smem>>) -> (i32, i32) {
    %c0_i32 = arith.constant 0 : i32
    %c0_i32_0 = arith.constant 0 : i32
    %c0_i32_1 = arith.constant 0 : i32
    return %c0_i32, %c0_i32_0 : i32, i32
  }
  func.func @transform_5(%arg0: i32, %arg1: i32, %arg2: memref<2x2xi32, #tpu.memory_space<smem>>) -> i32 {
    %c0_i32 = arith.constant 0 : i32
    %c0_i32_0 = arith.constant 0 : i32
    return %c0_i32 : i32
  }
  func.func @transform_6(%arg0: i32, %arg1: i32, %arg2: memref<2x2xi32, #tpu.memory_space<smem>>) -> (i32, i32, i32) {
    %c0_i32 = arith.constant 0 : i32
    %c0_i32_0 = arith.constant 0 : i32
    %c0_i32_1 = arith.constant 0 : i32
    return %arg0, %c0_i32, %c0_i32_0 : i32, i32, i32
  }
}

</mosaic_0001>

<llo_original>
// kernel: tpu_custom_call.1
$region0: #{tpu_custom_call.1}
  #allocation0 [shape = 'u32[]', space=smem, size = 0x4, offset = 0x4, fixed_abs, tag = 'smem constant byte address 0x4 - core index']
  #allocation1 [shape = 'u32[144,128]{1,0:T(1,128)}', space=vmem, size = 0x12000, scoped, tag = 'internal scratch']
  #allocation2 [shape = 's32[1]{0}', space=sflag, size = 0x4, scoped, tag = 'scoped memory for tpu_custom_call.1']
  #allocation3 [shape = 'u8[1024]{0}', space=smem, size = 0x400, scoped, tag = 'prefetched SMEM operand 0']
  #allocation4 [shape = 'f32[1]{0:T(128)S(6)}', space=smem, size = 0x200, scoped, tag = 'scoped memory for tpu_custom_call.1']
  %s0 = inlined_call_operand.vmem [shape: s32[2,2], index: 0, kind: input, shape index: {}]
  %s1 = inlined_call_operand.hbm [shape: s32[2,1,128], index: 1, kind: input, shape index: {}]
  %s2 = inlined_call_operand.vmem [shape: s32[2,1,128], index: 2, kind: input, shape index: {}]
  %s3 = inlined_call_operand.vmem [shape: f32[2,1,128], index: 3, kind: input, shape index: {}]
  %s4 = inlined_call_operand.hbm [shape: f32[2,16,128], index: 4, kind: input, shape index: {}]
  %s5 = inlined_call_operand.vmem [shape: f32[1,128], index: 5, kind: input, shape index: {}]
  %s6 = inlined_call_operand.<no memory space> [shape: f32[1], index: 6, kind: input, shape index: {}]
  %s7 = inlined_call_operand.hbm [shape: f32[2,8,128], index: 7, kind: output, shape index: {}]
  %s8 = sld [smem:[#allocation0]]
  $region77: #{tpu_custom_call.1} parent=0
    _
  %s10 = ssub.s32 1, %s8
  %s11 = scalar_select 0, %s10, %s8
  %s12 = sshll.u32 %s0, 4
  %s13 = int_to_ptr.vmem [resolvable:$true] %s12
  %15 = dma.vmem_to_smem %s13, 32, [#allocation3], [#allocation2]
  %16 = sst [smem:[#allocation4]] %s6
  %17 = dma.done [#allocation2], 32
  %18 = sfence
  $region1: #{tpu_custom_call.1} parent=0
    #allocation5 [shape = 'u8[1024]{0}', space=vmem, size = 0x400, scoped, tag = 'input window, operand 1']
    #allocation6 [shape = 's32[2]{0}', space=sflag, size = 0x8, scoped, tag = 'scoped memory for tpu_custom_call.1']
    #allocation7 [shape = 's32[2]{0}', space=sflag, size = 0x8, scoped, tag = 'scoped memory for tpu_custom_call.1']
    #allocation8 [shape = 'u8[8192]{0}', space=vmem, size = 0x2000, scoped, tag = 'input window, operand 4']
    #allocation9 [shape = 's32[2]{0}', space=sflag, size = 0x8, scoped, tag = 'scoped memory for tpu_custom_call.1']
    #allocation10 [shape = 'u8[8192]{0}', space=vmem, size = 0x2000, scoped, tag = 'output window, operand 0']
    %19 = vsyncpa [#allocation6], 0
    %s20 = scalar_lea.sflag [#allocation6], 1
    %21 = vsyncpa %s20, 0
    %22 = vsyncpa [#allocation9], 0
    %s23 = scalar_lea.sflag [#allocation9], 1
    %24 = vsyncpa %s23, 0
    %25 = vsyncpa [#allocation7], 0
    %s26 = scalar_lea.sflag [#allocation7], 1
    %27 = vsyncpa %s26, 0
    loop: start=0, step=1, limit=6
    $region2: #{tpu_custom_call.1} parent=1 // loop_pre_header
      _
    $region3: #{tpu_custom_call.1} parent=1 // loop_header
      %s29 = sphi 0, %s33
      %p30 = scmp.ge.s32.totalorder %s29, 6
      %s36 = sphi 0, %s48
      %s37 = sphi 0, %s44
      %s38 = sphi 0, %s36
      %s39 = sphi 0, %s37
      %s40 = sphi 0, %s38
      %s41 = sphi 0, %s39
      %s51 = sphi 0, %s53
      %s54 = sphi 0, %s51
      %s55 = sphi 0, %s54
      %s71 = sphi 0, %s55
      %s77 = sphi 0, %s79
      %s80 = sphi 0, %s77
      %s81 = sphi 0, %s80
      %s97 = sphi 0, %s81
      %s103 = sphi 0, %s105
      %s106 = sphi 0, %s103
      %s107 = sphi 0, %s106
      %s123 = sphi 0, %s107
      %s131 = sphi 0, %s133
      %s134 = sphi 0, %s131
      %s135 = sphi 0, %s134
      %s151 = sphi 0, %s135
      %s155 = sphi 0, %s155
      %s157 = sphi 0, %s155
      %s158 = sphi 0, %s157
      %s172 = sphi 0, %s158
      %s176 = sphi 0, %s176
      %s178 = sphi 0, %s176
      %s179 = sphi 0, %s178
      %s193 = sphi 0, %s179
      %s199 = sphi 0, %s201
      %s202 = sphi 0, %s199
      %s203 = sphi 0, %s202
      %s219 = sphi 0, %s203
    $region4: #{tpu_custom_call.1} parent=1 // loop_header_branch
      %32 = sbr.rel (%p30) target = $region8
    $region5: #{tpu_custom_call.1} parent=1 // loop_body
      %s34 = ssub.s32 %s29, 1
      %s35 = ssub.s32 %s29, 2
      %s42 = sadd.s32 1, %s37
      %p43 = scmp.ge.s32.totalorder %s42, 2
      %s44 = scalar_select %p43, 0, %s42
      %s45 = sadd.s32 1, %s36
      %s46 = scalar_select %p43, %s45, %s36
      %p47 = scmp.ge.s32.totalorder %s46, 2
      %s48 = scalar_select %p47, 0, %s46
      %s49 = ssub.s32 %s36, %s48
      %p50 = scmp.eq.s32.totalorder %s49, 0
      %s52 = sadd.s32 %s51, 1
      %s53 = scalar_select %p50, %s51, %s52
      %p56 = pneg %p50
      %p57 = scmp.eq.s32.totalorder %s29, 3
      %p58 = por %p56, %p57
      %p59 = scmp.ne.s32.totalorder %s51, %s54
      %p60 = scmp.eq.s32.totalorder %s29, 0
      %p61 = por %p59, %p60
      %p62 = scmp.ne.s32.totalorder %s51, %s54
      %p63 = scmp.eq.s32.totalorder %s34, 3
      %p64 = por %p62, %p63
      %p65 = scmp.ne.s32.totalorder %s54, %s55
      %p66 = scmp.eq.s32.totalorder %s34, 0
      %p67 = por %p65, %p66
      %p68 = scmp.ne.s32.totalorder %s54, %s55
      %p69 = scmp.eq.s32.totalorder %s35, 3
      %p70 = por %p68, %p69
      %p72 = scmp.ne.s32.totalorder %s55, %s71
      %p73 = scmp.eq.s32.totalorder %s35, 0
      %p74 = por %p72, %p73
      %s75 = ssub.s32 %s36, %s48
      %p76 = scmp.eq.s32.totalorder %s75, 0
      %s78 = sadd.s32 %s77, 1
      %s79 = scalar_select %p76, %s77, %s78
      %p82 = pneg %p76
      %p83 = scmp.eq.s32.totalorder %s29, 3
      %p84 = por %p82, %p83
      %p85 = scmp.ne.s32.totalorder %s77, %s80
      %p86 = scmp.eq.s32.totalorder %s29, 0
      %p87 = por %p85, %p86
      %p88 = scmp.ne.s32.totalorder %s77, %s80
      %p89 = scmp.eq.s32.totalorder %s34, 3
      %p90 = por %p88, %p89
      %p91 = scmp.ne.s32.totalorder %s80, %s81
      %p92 = scmp.eq.s32.totalorder %s34, 0
      %p93 = por %p91, %p92
      %p94 = scmp.ne.s32.totalorder %s80, %s81
      %p95 = scmp.eq.s32.totalorder %s35, 3
      %p96 = por %p94, %p95
      %p98 = scmp.ne.s32.totalorder %s81, %s97
      %p99 = scmp.eq.s32.totalorder %s35, 0
      %p100 = por %p98, %p99
      %s101 = ssub.s32 %s36, %s48
      %p102 = scmp.eq.s32.totalorder %s101, 0
      %s104 = sadd.s32 %s103, 1
      %s105 = scalar_select %p102, %s103, %s104
      %p108 = pneg %p102
      %p109 = scmp.eq.s32.totalorder %s29, 3
      %p110 = por %p108, %p109
      %p111 = scmp.ne.s32.totalorder %s103, %s106
      %p112 = scmp.eq.s32.totalorder %s29, 0
      %p113 = por %p111, %p112
      %p114 = scmp.ne.s32.totalorder %s103, %s106
      %p115 = scmp.eq.s32.totalorder %s34, 3
      %p116 = por %p114, %p115
      %p117 = scmp.ne.s32.totalorder %s106, %s107
      %p118 = scmp.eq.s32.totalorder %s34, 0
      %p119 = por %p117, %p118
      %p120 = scmp.ne.s32.totalorder %s106, %s107
      %p121 = scmp.eq.s32.totalorder %s35, 3
      %p122 = por %p120, %p121
      %p124 = scmp.ne.s32.totalorder %s107, %s123
      %p125 = scmp.eq.s32.totalorder %s35, 0
      %p126 = por %p124, %p125
      %s127 = ssub.s32 %s36, %s48
      %s128 = ssub.s32 %s37, %s44
      %s129 = sor.u32 %s127, %s128
      %p130 = scmp.eq.s32.totalorder %s129, 0
      %s132 = sadd.s32 %s131, 1
      %s133 = scalar_select %p130, %s131, %s132
      %p136 = pneg %p130
      %p137 = scmp.eq.s32.totalorder %s29, 3
      %p138 = por %p136, %p137
      %p139 = scmp.ne.s32.totalorder %s131, %s134
      %p140 = scmp.eq.s32.totalorder %s29, 0
      %p141 = por %p139, %p140
      %p142 = scmp.ne.s32.totalorder %s131, %s134
      %p143 = scmp.eq.s32.totalorder %s34, 3
      %p144 = por %p142, %p143
      %p145 = scmp.ne.s32.totalorder %s134, %s135
      %p146 = scmp.eq.s32.totalorder %s34, 0
      %p147 = por %p145, %p146
      %p148 = scmp.ne.s32.totalorder %s134, %s135
      %p149 = scmp.eq.s32.totalorder %s35, 3
      %p150 = por %p148, %p149
      %p152 = scmp.ne.s32.totalorder %s135, %s151
      %p153 = scmp.eq.s32.totalorder %s35, 0
      %p154 = por %p152, %p153
      %s156 = sadd.s32 %s155, 1
      %p159 = scmp.eq.s32.totalorder %s29, 3
      %p160 = scmp.ne.s32.totalorder %s155, %s157
      %p161 = scmp.eq.s32.totalorder %s29, 0
      %p162 = por %p160, %p161
      %p163 = scmp.ne.s32.totalorder %s155, %s157
      %p164 = scmp.eq.s32.totalorder %s34, 3
      %p165 = por %p163, %p164
      %p166 = scmp.ne.s32.totalorder %s157, %s158
      %p167 = scmp.eq.s32.totalorder %s34, 0
      %p168 = por %p166, %p167
      %p169 = scmp.ne.s32.totalorder %s157, %s158
      %p170 = scmp.eq.s32.totalorder %s35, 3
      %p171 = por %p169, %p170
      %p173 = scmp.ne.s32.totalorder %s158, %s172
      %p174 = scmp.eq.s32.totalorder %s35, 0
      %p175 = por %p173, %p174
      %s177 = sadd.s32 %s176, 1
      %p180 = scmp.eq.s32.totalorder %s29, 3
      %p181 = scmp.ne.s32.totalorder %s176, %s178
      %p182 = scmp.eq.s32.totalorder %s29, 0
      %p183 = por %p181, %p182
      %p184 = scmp.ne.s32.totalorder %s176, %s178
      %p185 = scmp.eq.s32.totalorder %s34, 3
      %p186 = por %p184, %p185
      %p187 = scmp.ne.s32.totalorder %s178, %s179
      %p188 = scmp.eq.s32.totalorder %s34, 0
      %p189 = por %p187, %p188
      %p190 = scmp.ne.s32.totalorder %s178, %s179
      %p191 = scmp.eq.s32.totalorder %s35, 3
      %p192 = por %p190, %p191
      %p194 = scmp.ne.s32.totalorder %s179, %s193
      %p195 = scmp.eq.s32.totalorder %s35, 0
      %p196 = por %p194, %p195
      %s197 = ssub.s32 %s36, %s48
      %p198 = scmp.eq.s32.totalorder %s197, 0
      %s200 = sadd.s32 %s199, 1
      %s201 = scalar_select %p198, %s199, %s200
      %p204 = pneg %p198
      %p205 = scmp.eq.s32.totalorder %s29, 3
      %p206 = por %p204, %p205
      %p207 = scmp.ne.s32.totalorder %s199, %s202
      %p208 = scmp.eq.s32.totalorder %s29, 0
      %p209 = por %p207, %p208
      %p210 = scmp.ne.s32.totalorder %s199, %s202
      %p211 = scmp.eq.s32.totalorder %s34, 3
      %p212 = por %p210, %p211
      %p213 = scmp.ne.s32.totalorder %s202, %s203
      %p214 = scmp.eq.s32.totalorder %s34, 0
      %p215 = por %p213, %p214
      %p216 = scmp.ne.s32.totalorder %s202, %s203
      %p217 = scmp.eq.s32.totalorder %s35, 3
      %p218 = por %p216, %p217
      %p220 = scmp.ne.s32.totalorder %s203, %s219
      %p221 = scmp.eq.s32.totalorder %s35, 0
      %p222 = por %p220, %p221
      %p223 = scmp.le.s32.totalorder 1, %s29
      %p224 = scmp.lt.s32.totalorder %s29, 5
      %p225 = pnand %p223, %p224
      %p226 = pneg %p225
      // Predicated region
      $region9: #{tpu_custom_call.1} parent=5 // pred_check
        _
      $region10: #{tpu_custom_call.1} parent=5 // pred_check_branch
        %228 = sbr.rel (%p225) target = $region12
      $region11: #{tpu_custom_call.1} parent=5 // pred_region
        %s229 = ssub.s32 %s29, 1
        // Predicated region
        $region13: #{tpu_custom_call.1} parent=11 // pred_check
          %p230 = pneg %p168
        $region14: #{tpu_custom_call.1} parent=11 // pred_check_branch
          %232 = sbr.rel (%p230) target = $region16
        $region15: #{tpu_custom_call.1} parent=11 // pred_region
          _
        $region16: #{tpu_custom_call.1} parent=11 // pred_fallthru
          _
        // Predicated region
        $region17: #{tpu_custom_call.1} parent=11 // pred_check
          %p233 = pneg %p189
        $region18: #{tpu_custom_call.1} parent=11 // pred_check_branch
          %235 = sbr.rel (%p233) target = $region20
        $region19: #{tpu_custom_call.1} parent=11 // pred_region
          _
        $region20: #{tpu_custom_call.1} parent=11 // pred_fallthru
          _
      $region12: #{tpu_custom_call.1} parent=5 // pred_fallthru
        _
      %p236 = scmp.lt.s32.totalorder %s29, 4
      // Predicated region
      $region21: #{tpu_custom_call.1} parent=5 // pred_check
        %p237 = pneg %p236
      $region22: #{tpu_custom_call.1} parent=5 // pred_check_branch
        %239 = sbr.rel (%p237) target = $region24
      $region23: #{tpu_custom_call.1} parent=5 // pred_region
        // Predicated region
        $region25: #{tpu_custom_call.1} parent=23 // pred_check
          %p240 = pneg %p61
        $region26: #{tpu_custom_call.1} parent=23 // pred_check_branch
          %242 = sbr.rel (%p240) target = $region28
        $region27: #{tpu_custom_call.1} parent=23 // pred_region
          %s243 = sand.u32 %s51, 1
          %s244 = scalar_lea.sflag [#allocation6], %s243
          %s245 = sand.u32 %s51, 1
          %s246 = scalar_lea.vmem [#allocation5], %s245
          %s248 = ssub.s32 16, 16
          %249 = vsyncadd %s244, %s248
          %s250 = smul.addr %s36, 16
          %s251 = scalar_lea.hbm %s1, %s250
          %s253 = sshll.u32 %s246, 4
          %s254 = int_to_ptr.vmem [resolvable:$true] %s253
          %256 = dma.hbm_to_vmem [thread:$0]  %s251, 16, %s254, %s244
        $region28: #{tpu_custom_call.1} parent=23 // pred_fallthru
          _
        // Predicated region
        $region29: #{tpu_custom_call.1} parent=23 // pred_check
          %p257 = pneg %p87
        $region30: #{tpu_custom_call.1} parent=23 // pred_check_branch
          %259 = sbr.rel (%p257) target = $region32
        $region31: #{tpu_custom_call.1} parent=23 // pred_region
          %p260 = scmp.lt.s32.totalorder %s36, 1
          %s261 = scalar_select %p260, %s36, 1
          %s262 = scalar_lea.vmem %s2, %s261
        $region32: #{tpu_custom_call.1} parent=23 // pred_fallthru
          _
        // Predicated region
        $region33: #{tpu_custom_call.1} parent=23 // pred_check
          %p263 = pneg %p113
        $region34: #{tpu_custom_call.1} parent=23 // pred_check_branch
          %265 = sbr.rel (%p263) target = $region36
        $region35: #{tpu_custom_call.1} parent=23 // pred_region
          %p266 = scmp.lt.s32.totalorder %s36, 1
          %s267 = scalar_select %p266, %s36, 1
          %s268 = scalar_lea.vmem %s3, %s267
        $region36: #{tpu_custom_call.1} parent=23 // pred_fallthru
          _
        // Predicated region
        $region37: #{tpu_custom_call.1} parent=23 // pred_check
          %p269 = pneg %p141
        $region38: #{tpu_custom_call.1} parent=23 // pred_check_branch
          %271 = sbr.rel (%p269) target = $region40
        $region39: #{tpu_custom_call.1} parent=23 // pred_region
          %s272 = sand.u32 %s131, 1
          %s273 = scalar_lea.sflag [#allocation9], %s272
          %s274 = sand.u32 %s131, 1
          %s275 = smul.addr %s274, 8
          %s276 = scalar_lea.vmem [#allocation8], %s275
          %s278 = ssub.s32 128, 128
          %279 = vsyncadd %s273, %s278
          %s280 = smul.addr %s36, 2
          %s281 = sadd.s32 %s37, %s280
          %s282 = smul.addr %s281, 128
          %s283 = scalar_lea.hbm %s4, %s282
          %s285 = sshll.u32 %s276, 4
          %s286 = int_to_ptr.vmem [resolvable:$true] %s285
          %288 = dma.hbm_to_vmem [thread:$0]  %s283, 128, %s286, %s273
        $region40: #{tpu_custom_call.1} parent=23 // pred_fallthru
          _
      $region24: #{tpu_custom_call.1} parent=5 // pred_fallthru
        _
      %p289 = scmp.le.s32.totalorder 1, %s29
      %p290 = scmp.lt.s32.totalorder %s29, 5
      %p291 = pnand %p289, %p290
      %p292 = pneg %p291
      // Predicated region
      $region41: #{tpu_custom_call.1} parent=5 // pred_check
        _
      $region42: #{tpu_custom_call.1} parent=5 // pred_check_branch
        %294 = sbr.rel (%p291) target = $region44
      $region43: #{tpu_custom_call.1} parent=5 // pred_region
        %s295 = ssub.s32 %s29, 1
        %s296 = sand.u32 %s54, 1
        %s297 = scalar_lea.sflag [#allocation6], %s296
        %s298 = sand.u32 %s54, 1
        %s299 = scalar_lea.vmem [#allocation5], %s298
        // Predicated region
        $region45: #{tpu_custom_call.1} parent=43 // pred_check
          %p300 = pneg %p67
        $region46: #{tpu_custom_call.1} parent=43 // pred_check_branch
          %302 = sbr.rel (%p300) target = $region48
        $region47: #{tpu_custom_call.1} parent=43 // pred_region
          %303 = dma.done %s297, 16
        $region48: #{tpu_custom_call.1} parent=43 // pred_fallthru
          _
        %s304 = sand.u32 %s134, 1
        %s305 = scalar_lea.sflag [#allocation9], %s304
        %s306 = sand.u32 %s134, 1
        %s307 = smul.addr %s306, 8
        %s308 = scalar_lea.vmem [#allocation8], %s307
        // Predicated region
        $region49: #{tpu_custom_call.1} parent=43 // pred_check
          %p309 = pneg %p147
        $region50: #{tpu_custom_call.1} parent=43 // pred_check_branch
          %311 = sbr.rel (%p309) target = $region52
        $region51: #{tpu_custom_call.1} parent=43 // pred_region
          %312 = dma.done %s305, 128
        $region52: #{tpu_custom_call.1} parent=43 // pred_fallthru
          _
        %s313 = sand.u32 %s54, 1
        %s314 = scalar_lea.sflag [#allocation6], %s313
        %s315 = sand.u32 %s54, 1
        %s316 = scalar_lea.vmem [#allocation5], %s315
        %p317 = pneg %p67
        %p318 = pneg %p64
        %p319 = scmp.lt.s32.totalorder %s38, 1
        %s320 = scalar_select %p319, %s38, 1
        %s321 = scalar_lea.vmem %s2, %s320
        %p322 = pneg %p93
        %p323 = pneg %p90
        %p324 = scmp.lt.s32.totalorder %s38, 1
        %s325 = scalar_select %p324, %s38, 1
        %s326 = scalar_lea.vmem %s3, %s325
        %p327 = pneg %p119
        %p328 = pneg %p116
        %s329 = sand.u32 %s134, 1
        %s330 = scalar_lea.sflag [#allocation9], %s329
        %s331 = sand.u32 %s134, 1
        %s332 = smul.addr %s331, 8
        %s333 = scalar_lea.vmem [#allocation8], %s332
        %p334 = pneg %p147
        %p335 = pneg %p144
        %p336 = pneg %p168
        %p337 = pneg %p165
        %p338 = pneg %p189
        %p339 = pneg %p186
        %p340 = pneg %p215
        %p341 = pneg %p212
        %s342 = sand.u32 %s202, 1
        %s343 = scalar_lea.sflag [#allocation7], %s342
        %s344 = sand.u32 %s202, 1
        %s345 = smul.addr %s344, 8
        %s346 = scalar_lea.vmem [#allocation10], %s345
        %p347 = scmp.lt.s32.totalorder %s38, 1
        %s348 = scalar_select %p347, %s38, 1
        %s349 = scalar_lea.vmem %s2, %s348
        %p350 = scmp.lt.s32.totalorder %s38, 1
        %s351 = scalar_select %p350, %s38, 1
        %s352 = scalar_lea.vmem %s3, %s351
        %p353 = scmp.eq.s32.totalorder %s39, 0
        // Predicated region
        $region53: #{tpu_custom_call.1} parent=43 // pred_check
          %p354 = pneg %p353
        $region54: #{tpu_custom_call.1} parent=43 // pred_check_branch
          %356 = sbr.rel (%p354) target = $region56
        $region55: #{tpu_custom_call.1} parent=43 // pred_region
          %357 = vst [vmem:[%s346] sm:$0xff] 0.0
        $region56: #{tpu_custom_call.1} parent=43 // pred_fallthru
          _
        %s358 = smul.u32 %s39, 8
        %s359 = smul.u32 %s38, 128
        %s360 = sld [smem:[#allocation3 + %s359]]
        %s361 = sadd.s32 %s359, 1
        %s362 = sld [smem:[#allocation3 + %s361]]
        %p363 = scmp.le.s32.totalorder %s358, %s362
        %s364 = sadd.s32 %s358, 7
        %p365 = scmp.ge.s32.totalorder %s364, %s360
        %p366 = pnand %p363, %p365
        %p367 = pneg %p366
        // Predicated region
        $region57: #{tpu_custom_call.1} parent=43 // pred_check
          _
        $region58: #{tpu_custom_call.1} parent=43 // pred_check_branch
          %369 = sbr.rel (%p366) target = $region60
        $region59: #{tpu_custom_call.1} parent=43 // pred_region
          %v370 = vld [vmem:[%s308] sm:$0xff]
          %vm371 = vcmp.ne.f32.partialorder %v370, %v370
          %v372 = vsel %vm371, 0.0, %v370
          %v373 = vld [vmem:[%s5] sm:$0x1]
          %v375 = vlaneseq
          %v376 = vshrl.u32 %v375, 7
          %v377 = vsub.s32 0, %v376
          %v378 = vrot.slane %v373, %v377
          %v380 = vmul.f32 %v372, %v378
          %381 = vadd.xlane.f32.xlu0 %v380
          %v382 = vpop.xlane.xlu0 %381
          %v383 = vlaneseq
          %v384 = vshrl.u32 %v383, 7
          %v385 = vstv %s358
          %v386 = vadd.s32 %v385, %v384
          %v387 = vld [vmem:[%s299] sm:$0x1]
          %v388 = vlaneseq
          %v389 = vshrl.u32 %v388, 7
          %v390 = vsub.s32 0, %v389
          %v391 = vrot.slane %v387, %v390
          %vm392 = vcmp.ge.s32.totalorder %v386, %v391
          %v393 = vld [vmem:[%s349] sm:$0x1]
          %v394 = vlaneseq
          %v395 = vshrl.u32 %v394, 7
          %v396 = vsub.s32 0, %v395
          %v397 = vrot.slane %v393, %v396
          %vm398 = vcmp.le.s32.totalorder %v386, %v397
          %vm399 = vmand %vm392, %vm398
          %v400 = vsel %vm399, 1, 0
          %v401 = vcvt.s32.f32 %v400
          %v402 = vmul.f32 %v401, %v382
          %v403 = vrot.slane %v402, 4
          %v404 = vadd.f32 %v402, %v403
          %v405 = vrot.slane %v404, 2
          %v406 = vadd.f32 %v404, %v405
          %v407 = vrot.slane %v406, 1
          %v408 = vadd.f32 %v406, %v407
          %v409 = vld [vmem:[%s346] sm:$0xff]
          %v410 = vadd.f32 %v409, %v408
          %411 = vst [vmem:[%s346] sm:$0xff] %v410
        $region60: #{tpu_custom_call.1} parent=43 // pred_fallthru
          _
        %p412 = scmp.eq.s32.totalorder %s39, 1
        // Predicated region
        $region61: #{tpu_custom_call.1} parent=43 // pred_check
          %p413 = pneg %p412
        $region62: #{tpu_custom_call.1} parent=43 // pred_check_branch
          %415 = sbr.rel (%p413) target = $region64
        $region63: #{tpu_custom_call.1} parent=43 // pred_region
          %v416 = vld [vmem:[%s346] sm:$0xff]
          %v417 = vld [vmem:[%s352] sm:$0x1]
          %v419 = vlaneseq
          %v420 = vshrl.u32 %v419, 7
          %v421 = vsub.s32 0, %v420
          %v422 = vrot.slane %v417, %v421
          %v424 = vmul.f32 %v416, %v422
          %s425 = sld [smem:[#allocation4]]
          %v426 = vstv %s425
          %v427 = vadd.f32 %v424, %v426
          %428 = vst [vmem:[%s346] sm:$0xff] %v427
        $region64: #{tpu_custom_call.1} parent=43 // pred_fallthru
          _
        %s429 = sand.u32 %s202, 1
        %s430 = scalar_lea.sflag [#allocation7], %s429
        %s431 = sand.u32 %s202, 1
        %s432 = smul.addr %s431, 8
        %s433 = scalar_lea.vmem [#allocation10], %s432
        // Predicated region
        $region65: #{tpu_custom_call.1} parent=43 // pred_check
          %p434 = pneg %p212
        $region66: #{tpu_custom_call.1} parent=43 // pred_check_branch
          %436 = sbr.rel (%p434) target = $region68
        $region67: #{tpu_custom_call.1} parent=43 // pred_region
          %s438 = ssub.s32 128, 128
          %439 = vsyncadd %s430, %s438
          %s440 = smul.addr %s38, 128
          %s441 = scalar_lea.hbm %s7, %s440
          %s443 = sshll.u32 %s433, 4
          %s444 = int_to_ptr.vmem [resolvable:$true] %s443
          %446 = dma.vmem_to_hbm [thread:$0]  %s444, 128, %s441, %s430
        $region68: #{tpu_custom_call.1} parent=43 // pred_fallthru
          _
      $region44: #{tpu_custom_call.1} parent=5 // pred_fallthru
        _
      %p447 = scmp.le.s32.totalorder 2, %s29
      // Predicated region
      $region69: #{tpu_custom_call.1} parent=5 // pred_check
        %p448 = pneg %p447
      $region70: #{tpu_custom_call.1} parent=5 // pred_check_branch
        %450 = sbr.rel (%p448) target = $region72
      $region71: #{tpu_custom_call.1} parent=5 // pred_region
        %s451 = ssub.s32 %s29, 2
        // Predicated region
        $region73: #{tpu_custom_call.1} parent=71 // pred_check
          %p452 = pneg %p218
        $region74: #{tpu_custom_call.1} parent=71 // pred_check_branch
          %454 = sbr.rel (%p452) target = $region76
        $region75: #{tpu_custom_call.1} parent=71 // pred_region
          %s455 = sand.u32 %s203, 1
          %s456 = scalar_lea.sflag [#allocation7], %s455
          %s457 = sand.u32 %s203, 1
          %s458 = smul.addr %s457, 8
          %s459 = scalar_lea.vmem [#allocation10], %s458
          %460 = dma.done %s456, 128
        $region76: #{tpu_custom_call.1} parent=71 // pred_fallthru
          _
      $region72: #{tpu_custom_call.1} parent=5 // pred_fallthru
        _
    $region6: #{tpu_custom_call.1} parent=1 // loop_footer
      %s33 = sadd.s32 1, %s29
    $region7: #{tpu_custom_call.1} parent=1 // loop_footer_branch
      %28 = sbr.rel target = $region3
    $region8: #{tpu_custom_call.1} parent=1 // loop_exit
      _
    %461 = vsyncpa [#allocation6], 1
    %s462 = scalar_lea.sflag [#allocation6], 1
    %463 = vsyncpa %s462, 1
    %464 = vsyncpa [#allocation9], 1
    %s465 = scalar_lea.sflag [#allocation9], 1
    %466 = vsyncpa %s465, 1
    %467 = vsyncpa [#allocation7], 1
    %s468 = scalar_lea.sflag [#allocation7], 1
    %469 = vsyncpa %s468, 1

</llo_original>
